<compile_context>
chip_gen: v6e
topology: v6e:2x2x1
jax: 0.10.0
libtpu: 0.0.40
codegen_flags: <defaults>
</compile_context>

<pallas_src>
import jax
import jax.numpy as jnp
from jax.experimental import pallas as pl
from jax.experimental.pallas import tpu as pltpu


def _round_up(n, m):
    return (n + m - 1) // m * m


def _qnet_kernel(x_ref, w1_ref, b1_ref, w2_ref, b2_ref, o_ref):
    # hidden = relu(x @ W1 + b1); f32 MXU accumulation, f32 epilogue.
    x = x_ref[...].astype(w1_ref.dtype)                 # cast in-kernel (cheap, VPU)
    h = jnp.dot(x, w1_ref[...], preferred_element_type=jnp.float32)
    h = jnp.maximum(h + b1_ref[...], 0.0)               # b1 is (1, HID_P) -> broadcast
    # out = hidden @ W2 + b2; downcast only for the second MXU pass.
    h = h.astype(w2_ref.dtype)
    o = jnp.dot(h, w2_ref[...], preferred_element_type=jnp.float32)
    o_ref[...] = (o + b2_ref[...]).astype(o_ref.dtype)


def linear_qnet_forward(x, w1, b1, w2, b2, *, block_b=4096,
                        compute_dtype=jnp.bfloat16):
    """Forward pass of Linear_QNet.

    x : (B, in), w1 : (in, hidden), b1 : (hidden,) or (1, hidden),
    w2 : (hidden, out), b2 : (out,) or (1, out).  Returns (B, out) in x.dtype.

    compute_dtype controls the matmul input dtype (default bf16, f32 accum);
    pass jnp.float32 to match the PyTorch f32 module bit-for-bit-ish.
    """
    B, in_size = x.shape
    hid = w1.shape[1]
    out_size = w2.shape[1]
    out_dtype = x.dtype

    # Hidden dim padded to a full lane width so both matmuls see a lane-dense
    # intermediate; in/out dims are left at their true sizes (== full array
    # dim, which is a legal BlockSpec shape) so no x / output padding exists.
    HID_P = _round_up(hid, 128)

    # --- batch tiling -----------------------------------------------------
    num_tiles = max(pl.cdiv(B, block_b), 1)
    if num_tiles == 1 and B >= 1024:
        num_tiles = 2                      # let both v7x TensorCores work
    TB = _round_up(pl.cdiv(B, num_tiles), 8)
    grid_b = pl.cdiv(B, TB)                # partial last block handled by Pallas

    # --- weights / biases: tiny, padded + cast once in the wrapper ---------
    w1p = jnp.pad(w1, ((0, 0), (0, HID_P - hid))).astype(compute_dtype)   # (in, HID_P)
    w2p = jnp.pad(w2, ((0, HID_P - hid), (0, 0))).astype(compute_dtype)   # (HID_P, out)
    b1p = jnp.pad(jnp.reshape(b1, (1, -1)),
                  ((0, 0), (0, HID_P - hid))).astype(jnp.float32)         # (1, HID_P)
    b2p = jnp.reshape(b2, (1, -1)).astype(jnp.float32)                    # (1, out)

    # --- VMEM budget (double-buffered streams + f32 intermediates) ---------
    lane = 128
    x_tile = TB * _round_up(in_size, lane) * x.dtype.itemsize
    o_tile = TB * _round_up(out_size, lane) * jnp.dtype(out_dtype).itemsize
    h_tile = TB * HID_P * 4
    w_bytes = (w1p.size + w2p.size) * jnp.dtype(compute_dtype).itemsize \
        + (b1p.size + b2p.size) * 4
    need = 2 * (x_tile + o_tile) + 3 * h_tile + 2 * w_bytes + (8 << 20)
    vmem_limit = int(min(max(need, 32 << 20), 56 << 20))

    cost = pl.CostEstimate(
        flops=2 * B * (in_size * hid + hid * out_size),
        transcendentals=0,
        bytes_accessed=int(x.size * x.dtype.itemsize
                           + B * out_size * jnp.dtype(out_dtype).itemsize
                           + w_bytes),
    )

    out = pl.pallas_call(
        _qnet_kernel,
        out_shape=jax.ShapeDtypeStruct((B, out_size), out_dtype),
        grid=(grid_b,),
        in_specs=[
            pl.BlockSpec((TB, in_size), lambda i: (i, 0)),    # x: batch-tiled, unpadded
            pl.BlockSpec((in_size, HID_P), lambda i: (0, 0)),  # W1: VMEM-resident
            pl.BlockSpec((1, HID_P), lambda i: (0, 0)),        # b1: VMEM-resident
            pl.BlockSpec((HID_P, out_size), lambda i: (0, 0)),  # W2: VMEM-resident
            pl.BlockSpec((1, out_size), lambda i: (0, 0)),      # b2: VMEM-resident
        ],
        out_specs=pl.BlockSpec((TB, out_size), lambda i: (i, 0)),  # only real cols
        compiler_params=pltpu.CompilerParams(
            dimension_semantics=("parallel",),
            vmem_limit_bytes=vmem_limit),
        cost_estimate=cost,
    )(x, w1p, b1p, w2p, b2p)
    return out


def init_params(key, input_size, hidden_size, output_size, dtype=jnp.float32):
    """Deterministic init mimicking nn.Linear (uniform +/- 1/sqrt(fan_in)).
    Weights stored as (in_features, out_features) == PyTorch weight.T."""
    k1, k2, k3, k4 = jax.random.split(key, 4)
    bound1 = 1.0 / jnp.sqrt(input_size)
    bound2 = 1.0 / jnp.sqrt(hidden_size)
    w1 = jax.random.uniform(k1, (input_size, hidden_size), dtype, -bound1, bound1)
    b1 = jax.random.uniform(k2, (hidden_size,), dtype, -bound1, bound1)
    w2 = jax.random.uniform(k3, (hidden_size, output_size), dtype, -bound2, bound2)
    b2 = jax.random.uniform(k4, (output_size,), dtype, -bound2, bound2)
    return w1, b1, w2, b2


def _check(x, w1, b1, w2, b2, out, atol_bf16=1e-3, atol_f32=5e-2):
    # Reference 1: same bf16-matmul / f32-accumulate recipe in pure JAX (tight).
    xb, w1b, w2b = (a.astype(jnp.bfloat16) for a in (x, w1, w2))
    h_ref = jnp.maximum(
        jnp.dot(xb, w1b, preferred_element_type=jnp.float32) + b1[None, :], 0.0)
    ref_bf16 = jnp.dot(h_ref.astype(jnp.bfloat16), w2b,
                       preferred_element_type=jnp.float32) + b2[None, :]
    assert jnp.allclose(out.astype(jnp.float32), ref_bf16,
                        atol=atol_bf16, rtol=atol_bf16), "bf16-recipe mismatch"
    # Reference 2: full f32 math (loose tolerance for bf16 matmul inputs).
    ref_f32 = jnp.maximum(x @ w1 + b1[None, :], 0.0) @ w2 + b2[None, :]
    assert jnp.allclose(out.astype(jnp.float32), ref_f32,
                        atol=atol_f32, rtol=atol_f32), "f32 reference mismatch"


if __name__ == "__main__":
    # Typical Linear_QNet (snake agent) sizes, kept small and deterministic.
    # NOTE: at tiny batches the call is pure launch overhead; the tiling pays
    # off at large B (the B=2048 case below exercises the 2-tile grid path).
    input_size, hidden_size, output_size = 11, 32, 3

    key = jax.random.PRNGKey(0)
    kx, kp = jax.random.split(key)
    w1, b1, w2, b2 = init_params(kp, input_size, hidden_size, output_size)

    for batch in (8, 300, 2048):   # single tile / partial block / 2-tile grid
        xb_key = jax.random.fold_in(kx, batch)
        x = jax.random.normal(xb_key, (batch, input_size), jnp.float32)
        out = linear_qnet_forward(x, w1, b1, w2, b2)
        out = jax.block_until_ready(out)
        assert out.shape == (batch, output_size)
        assert out.dtype == x.dtype
        _check(x, w1, b1, w2, b2, out)

    # TODO(synk): save()/load() checkpoint I/O (torch.save/load) and training
    # utilities are host-side and intentionally not part of the kernel.
    print("KERNEL_OK")
</pallas_src>

<mosaic_0001>
module attributes {stable_mosaic.version = 11 : i64} {
  func.func @_qnet_kernel(%arg0: i32, %arg1: memref<8x11xf32, #tpu.memory_space<vmem>>, %arg2: memref<11x128xbf16, #tpu.memory_space<vmem>>, %arg3: memref<1x128xf32, #tpu.memory_space<vmem>>, %arg4: memref<128x3xbf16, #tpu.memory_space<vmem>>, %arg5: memref<1x3xf32, #tpu.memory_space<vmem>>, %arg6: memref<8x3xf32, #tpu.memory_space<vmem>>) attributes {dimension_semantics = [#tpu.dimension_semantics<parallel>], iteration_bounds = array<i64: 1>, scalar_prefetch = 0 : i64, scratch_operands = 0 : i64, tpu.core_type = #tpu.core_type<tc>, window_params = [{transform_indices = @transform_0, window_bounds = array<i64: 8, 11>}, {pipeline_mode = #tpu.pipeline_mode<synchronous>, transform_indices = @transform_1, window_bounds = array<i64: 11, 128>}, {pipeline_mode = #tpu.pipeline_mode<synchronous>, transform_indices = @transform_2, window_bounds = array<i64: 1, 128>}, {pipeline_mode = #tpu.pipeline_mode<synchronous>, transform_indices = @transform_3, window_bounds = array<i64: 128, 3>}, {pipeline_mode = #tpu.pipeline_mode<synchronous>, transform_indices = @transform_4, window_bounds = array<i64: 1, 3>}, {transform_indices = @transform_5, window_bounds = array<i64: 8, 3>}]} {
    %c0 = arith.constant 0 : index
    %c0_0 = arith.constant 0 : index
    %0 = vector.load %arg1[%c0, %c0_0] : memref<8x11xf32, #tpu.memory_space<vmem>>, vector<8x11xf32>
    %1 = arith.truncf %0 : vector<8x11xf32> to vector<8x11xbf16>
    %c0_1 = arith.constant 0 : index
    %c0_2 = arith.constant 0 : index
    %2 = vector.load %arg2[%c0_1, %c0_2] : memref<11x128xbf16, #tpu.memory_space<vmem>>, vector<11x128xbf16>
    %cst = arith.constant dense<0.000000e+00> : vector<8x128xf32>
    %3 = tpu.matmul %1, %2, %cst {dimension_numbers = #tpu.dot_dimension_numbers<[1], [0], [0], [1], [0, 0, 1, 1], [], []>} : vector<8x11xbf16>, vector<11x128xbf16>, vector<8x128xf32> -> vector<8x128xf32>
    %c0_3 = arith.constant 0 : index
    %c0_4 = arith.constant 0 : index
    %4 = vector.load %arg3[%c0_3, %c0_4] : memref<1x128xf32, #tpu.memory_space<vmem>>, vector<1x128xf32>
    %5 = vector.broadcast %4 : vector<1x128xf32> to vector<8x128xf32>
    %6 = arith.addf %3, %5 : vector<8x128xf32>
    %cst_5 = arith.constant 0.000000e+00 : f32
    %7 = vector.broadcast %cst_5 : f32 to vector<8x128xf32>
    %8 = arith.maximumf %6, %7 : vector<8x128xf32>
    %9 = arith.truncf %8 : vector<8x128xf32> to vector<8x128xbf16>
    %c0_6 = arith.constant 0 : index
    %c0_7 = arith.constant 0 : index
    %10 = vector.load %arg4[%c0_6, %c0_7] : memref<128x3xbf16, #tpu.memory_space<vmem>>, vector<128x3xbf16>
    %cst_8 = arith.constant dense<0.000000e+00> : vector<8x3xf32>
    %11 = tpu.matmul %9, %10, %cst_8 {dimension_numbers = #tpu.dot_dimension_numbers<[1], [0], [0], [1], [0, 0, 1, 1], [], []>} : vector<8x128xbf16>, vector<128x3xbf16>, vector<8x3xf32> -> vector<8x3xf32>
    %c0_9 = arith.constant 0 : index
    %c0_10 = arith.constant 0 : index
    %12 = vector.load %arg5[%c0_9, %c0_10] : memref<1x3xf32, #tpu.memory_space<vmem>>, vector<1x3xf32>
    %13 = vector.broadcast %12 : vector<1x3xf32> to vector<8x3xf32>
    %14 = arith.addf %11, %13 : vector<8x3xf32>
    %c0_11 = arith.constant 0 : index
    %c0_12 = arith.constant 0 : index
    %15 = vector.load %arg6[%c0_11, %c0_12] : memref<8x3xf32, #tpu.memory_space<vmem>>, vector<8x3xf32>
    tpu.vector_store %arg6[%c0_11, %c0_12], %14 {strides = array<i32>} : memref<8x3xf32, #tpu.memory_space<vmem>>, vector<8x3xf32>,
    return
  }
  func.func @transform_0(%arg0: i32) -> (i32, i32) {
    %c0_i32 = arith.constant 0 : i32
    %c0_i32_0 = arith.constant 0 : i32
    return %arg0, %c0_i32 : i32, i32
  }
  func.func @transform_1(%arg0: i32) -> (i32, i32) {
    %c0_i32 = arith.constant 0 : i32
    %c0_i32_0 = arith.constant 0 : i32
    %c0_i32_1 = arith.constant 0 : i32
    return %c0_i32, %c0_i32_0 : i32, i32
  }
  func.func @transform_2(%arg0: i32) -> (i32, i32) {
    %c0_i32 = arith.constant 0 : i32
    %c0_i32_0 = arith.constant 0 : i32
    %c0_i32_1 = arith.constant 0 : i32
    return %c0_i32, %c0_i32_0 : i32, i32
  }
  func.func @transform_3(%arg0: i32) -> (i32, i32) {
    %c0_i32 = arith.constant 0 : i32
    %c0_i32_0 = arith.constant 0 : i32
    %c0_i32_1 = arith.constant 0 : i32
    return %c0_i32, %c0_i32_0 : i32, i32
  }
  func.func @transform_4(%arg0: i32) -> (i32, i32) {
    %c0_i32 = arith.constant 0 : i32
    %c0_i32_0 = arith.constant 0 : i32
    %c0_i32_1 = arith.constant 0 : i32
    return %c0_i32, %c0_i32_0 : i32, i32
  }
  func.func @transform_5(%arg0: i32) -> (i32, i32) {
    %c0_i32 = arith.constant 0 : i32
    %c0_i32_0 = arith.constant 0 : i32
    return %arg0, %c0_i32 : i32, i32
  }
}

</mosaic_0001>

<llo_original>
// kernel: tpu_custom_call.1
$region0: #{tpu_custom_call.1}
  #allocation0 [shape = 'u32[]', space=smem, size = 0x4, offset = 0x4, fixed_abs, tag = 'smem constant byte address 0x4 - core index']
  #allocation1 [shape = 'u32[144,128]{1,0:T(1,128)}', space=vmem, size = 0x12000, scoped, tag = 'internal scratch']
  %s0 = inlined_call_operand.vmem [shape: f32[8,11], index: 0, kind: input, shape index: {}]
  %s1 = inlined_call_operand.vmem [shape: bf16[11,128], index: 1, kind: input, shape index: {}]
  %s2 = inlined_call_operand.vmem [shape: f32[1,128], index: 2, kind: input, shape index: {}]
  %s3 = inlined_call_operand.vmem [shape: bf16[128,3], index: 3, kind: input, shape index: {}]
  %s4 = inlined_call_operand.vmem [shape: f32[1,3], index: 4, kind: input, shape index: {}]
  %s5 = inlined_call_operand.vmem [shape: f32[8,3], index: 5, kind: output, shape index: {}]
  %s6 = sld [smem:[#allocation0]]
  $region30: #{tpu_custom_call.1} parent=0
    _
  %s8 = ssub.s32 1, %s6
  %s9 = scalar_select 0, %s8, %s6
  // Predicated region
  $region2: #{tpu_custom_call.1} parent=0 // pred_check
    _
  $region3: #{tpu_custom_call.1} parent=0 // pred_check_branch
    %11 = sbr.rel (0) target = $region5
  $region4: #{tpu_custom_call.1} parent=0 // pred_region
    _
  $region5: #{tpu_custom_call.1} parent=0 // pred_fallthru
    _
  // Predicated region
  $region6: #{tpu_custom_call.1} parent=0 // pred_check
    _
  $region7: #{tpu_custom_call.1} parent=0 // pred_check_branch
    %13 = sbr.rel (0) target = $region9
  $region8: #{tpu_custom_call.1} parent=0 // pred_region
    _
  $region9: #{tpu_custom_call.1} parent=0 // pred_fallthru
    _
  // Predicated region
  $region10: #{tpu_custom_call.1} parent=0 // pred_check
    _
  $region11: #{tpu_custom_call.1} parent=0 // pred_check_branch
    %15 = sbr.rel (0) target = $region13
  $region12: #{tpu_custom_call.1} parent=0 // pred_region
    _
  $region13: #{tpu_custom_call.1} parent=0 // pred_fallthru
    _
  // Predicated region
  $region14: #{tpu_custom_call.1} parent=0 // pred_check
    _
  $region15: #{tpu_custom_call.1} parent=0 // pred_check_branch
    %17 = sbr.rel (0) target = $region17
  $region16: #{tpu_custom_call.1} parent=0 // pred_region
    _
  $region17: #{tpu_custom_call.1} parent=0 // pred_fallthru
    _
  // Predicated region
  $region18: #{tpu_custom_call.1} parent=0 // pred_check
    _
  $region19: #{tpu_custom_call.1} parent=0 // pred_check_branch
    %19 = sbr.rel (0) target = $region21
  $region20: #{tpu_custom_call.1} parent=0 // pred_region
    _
  $region21: #{tpu_custom_call.1} parent=0 // pred_fallthru
    _
  %v21 = vld [vmem:[%s0] sm:$0xff]
  %v22 = vpack.c.bf16 %v21, %v21
  %v23 = vld [vmem:[%s1] sm:$0xf]
  %v24 = vld [vmem:[%s1 + $0x4] sm:$0x3]
  %v25 = vld [vmem:[%s2] sm:$0x1]
  %v27 = vlaneseq
  %v28 = vshrl.u32 %v27, 7
  %v29 = vsub.s32 0, %v28
  %v30 = vrot.slane %v25, %v29
  %v34 = vunpack.c.l.b16 %v23
  %v35 = vunpack.c.l.b16 %v24
  %v36 = vpack.c.b16 %v35, %v34
  %vm37 = vcmask 89088
  %v39 = vsel %vm37, %v22, 0
  %vm41 = vcmask 1044480
  %vm42 = vcmask 1045504
  %v43 = vsel %vm41, 4294967295, 65535
  %v44 = vsel %vm42, %v43, 0
  %v46 = vand.u32 %v36, %v44
  %48 = vmatprep.subr.bf16.mxu0 0
  %49 = vmatpush1.bf16.msra.mxu0 0
  %50 = vmatprep.subr.bf16.mxu0 0
  %51 = vmatpush1.bf16.msra.mxu0 0
  %52 = vmatprep.subr.bf16.mxu0 0
  %53 = vmatpush1.bf16.msra.mxu0 0
  %54 = vmatprep.subr.bf16.mxu0 0
  %55 = vmatpush1.bf16.msra.mxu0 0
  %56 = vmatprep.subr.bf16.mxu0 0
  %57 = vmatpush1.bf16.msra.mxu0 0
  %58 = vmatprep.subr.bf16.mxu0 0
  %59 = vmatpush1.bf16.msra.mxu0 0
  %60 = vmatprep.subr.bf16.mxu0 0
  %61 = vmatpush1.bf16.msra.mxu0 0
  %62 = vmatprep.subr.bf16.mxu0 0
  %63 = vmatpush1.bf16.msra.mxu0 %v46
  %64 = vmatprep.subr.bf16.mxu0 0
  %65 = vmatpush2.bf16.msra.mxu0 0
  %66 = vmatprep.subr.bf16.mxu0 0
  %67 = vmatpush2.bf16.msra.mxu0 0
  %68 = vmatprep.subr.bf16.mxu0 0
  %69 = vmatpush2.bf16.msra.mxu0 0
  %70 = vmatprep.subr.bf16.mxu0 0
  %71 = vmatpush2.bf16.msra.mxu0 0
  %72 = vmatprep.subr.bf16.mxu0 0
  %73 = vmatpush2.bf16.msra.mxu0 0
  %74 = vmatprep.subr.bf16.mxu0 0
  %75 = vmatpush2.bf16.msra.mxu0 0
  %76 = vmatprep.subr.bf16.mxu0 0
  %77 = vmatpush2.bf16.msra.mxu0 0
  %78 = vmatprep.subr.bf16.mxu0 0
  %79 = vmatpush2.bf16.msra.mxu0 0
  %80 = vmatprep.mubr.bf16.mxu0 0
  %81 = vmatmul.mubr.bf16.gmra.mxu0 %v39
  %v82 = vpop.f32.mrf.mxu0
  %v83 = vadd.f32 %v30, %v82
  %v84 = vpop.f32.mrf.mxu0
  %v85 = vpop.f32.mrf.mxu0
  %v86 = vpop.f32.mrf.mxu0
  %87 = vdwg.mxu0
  %v88 = vmax.f32 %v83, 0.0
  %v89 = vpack.c.bf16 %v88, %v88
  %v90 = vld [vmem:[%s3] sm:$0xf]
  %v91 = vld [vmem:[%s3 + $0x4] sm:$0xf]
  %v92 = vld [vmem:[%s3 + $0x8] sm:$0xf]
  %v93 = vld [vmem:[%s3 + $0xc] sm:$0xf]
  %v94 = vld [vmem:[%s3 + $0x10] sm:$0xf]
  %v95 = vld [vmem:[%s3 + $0x14] sm:$0xf]
  %v96 = vld [vmem:[%s3 + $0x18] sm:$0xf]
  %v97 = vld [vmem:[%s3 + $0x1c] sm:$0xf]
  %v98 = vld [vmem:[%s3 + $0x20] sm:$0xf]
  %v99 = vld [vmem:[%s3 + $0x24] sm:$0xf]
  %v100 = vld [vmem:[%s3 + $0x28] sm:$0xf]
  %v101 = vld [vmem:[%s3 + $0x2c] sm:$0xf]
  %v102 = vld [vmem:[%s3 + $0x30] sm:$0xf]
  %v103 = vld [vmem:[%s3 + $0x34] sm:$0xf]
  %v104 = vld [vmem:[%s3 + $0x38] sm:$0xf]
  %v105 = vld [vmem:[%s3 + $0x3c] sm:$0xf]
  %v106 = vld [vmem:[%s4] sm:$0x1]
  %v108 = vlaneseq
  %v109 = vshrl.u32 %v108, 7
  %v110 = vsub.s32 0, %v109
  %v111 = vrot.slane %v106, %v110
  %v129 = vunpack.c.l.b16 %v90
  %v130 = vunpack.c.l.b16 %v91
  %v131 = vunpack.c.l.b16 %v92
  %v132 = vunpack.c.l.b16 %v93
  %v133 = vunpack.c.l.b16 %v94
  %v134 = vunpack.c.l.b16 %v95
  %v135 = vunpack.c.l.b16 %v96
  %v136 = vunpack.c.l.b16 %v97
  %v137 = vunpack.c.l.b16 %v98
  %v138 = vunpack.c.l.b16 %v99
  %v139 = vunpack.c.l.b16 %v100
  %v140 = vunpack.c.l.b16 %v101
  %v141 = vunpack.c.l.b16 %v102
  %v142 = vunpack.c.l.b16 %v103
  %v143 = vunpack.c.l.b16 %v104
  %v144 = vunpack.c.l.b16 %v105
  %v145 = vpack.c.b16 %v130, %v129
  %v146 = vpack.c.b16 %v132, %v131
  %v147 = vpack.c.b16 %v134, %v133
  %v148 = vpack.c.b16 %v136, %v135
  %v149 = vpack.c.b16 %v138, %v137
  %v150 = vpack.c.b16 %v140, %v139
  %v151 = vpack.c.b16 %v142, %v141
  %v152 = vpack.c.b16 %v144, %v143
  %161 = vmatprep.subr.bf16.mxu0 0
  %162 = vmatpush1.bf16.msra.mxu0 %v152
  %163 = vmatprep.subr.bf16.mxu0 0
  %164 = vmatpush1.bf16.msra.mxu0 %v151
  %165 = vmatprep.subr.bf16.mxu0 0
  %166 = vmatpush1.bf16.msra.mxu0 %v150
  %167 = vmatprep.subr.bf16.mxu0 0
  %168 = vmatpush1.bf16.msra.mxu0 %v149
  %169 = vmatprep.subr.bf16.mxu0 0
  %170 = vmatpush1.bf16.msra.mxu0 %v148
  %171 = vmatprep.subr.bf16.mxu0 0
  %172 = vmatpush1.bf16.msra.mxu0 %v147
  %173 = vmatprep.subr.bf16.mxu0 0
  %174 = vmatpush1.bf16.msra.mxu0 %v146
  %175 = vmatprep.subr.bf16.mxu0 0
  %176 = vmatpush1.bf16.msra.mxu0 %v145
  %177 = vmatprep.subr.bf16.mxu0 0
  %178 = vmatpush2.bf16.msra.mxu0 0
  %179 = vmatprep.subr.bf16.mxu0 0
  %180 = vmatpush2.bf16.msra.mxu0 0
  %181 = vmatprep.subr.bf16.mxu0 0
  %182 = vmatpush2.bf16.msra.mxu0 0
  %183 = vmatprep.subr.bf16.mxu0 0
  %184 = vmatpush2.bf16.msra.mxu0 0
  %185 = vmatprep.subr.bf16.mxu0 0
  %186 = vmatpush2.bf16.msra.mxu0 0
  %187 = vmatprep.subr.bf16.mxu0 0
  %188 = vmatpush2.bf16.msra.mxu0 0
  %189 = vmatprep.subr.bf16.mxu0 0
  %190 = vmatpush2.bf16.msra.mxu0 0
  %191 = vmatprep.subr.bf16.mxu0 0
  %192 = vmatpush2.bf16.msra.mxu0 0
  %193 = vmatprep.mubr.bf16.mxu0 0
  %194 = vmatmul.mubr.bf16.gmra.mxu0 %v89
  %v195 = vpop.f32.mrf.mxu0
  %v196 = vadd.f32 %v111, %v195
  %v197 = vpop.f32.mrf.mxu0
  %v198 = vpop.f32.mrf.mxu0
  %v199 = vpop.f32.mrf.mxu0
  %200 = vdwg.mxu0
  %vm201 = vcmask 23552
  %202 = vst.msk [vmem:[%s5] sm:$0xff] %vm201, %v196
  // Predicated region
  $region22: #{tpu_custom_call.1} parent=0 // pred_check
    _
  $region23: #{tpu_custom_call.1} parent=0 // pred_check_branch
    %204 = sbr.rel (0) target = $region25
  $region24: #{tpu_custom_call.1} parent=0 // pred_region
    _
  $region25: #{tpu_custom_call.1} parent=0 // pred_fallthru
    _
  // Predicated region
  $region26: #{tpu_custom_call.1} parent=0 // pred_check
    _
  $region27: #{tpu_custom_call.1} parent=0 // pred_check_branch
    %206 = sbr.rel (0) target = $region29
  $region28: #{tpu_custom_call.1} parent=0 // pred_region
    _
  $region29: #{tpu_custom_call.1} parent=0 // pred_fallthru
    _

</llo_original>
